<compile_context>
chip_gen: v5e
topology: v5e:2x2
jax: 0.10.0
libtpu: 0.0.40
codegen_flags: <defaults>
</compile_context>

<pallas_src>
import functools

import jax
import jax.numpy as jnp
from jax import lax
from jax.experimental import pallas as pl
from jax.experimental.pallas import tpu as pltpu


# ----------------------------------------------------------------------------
# helpers
# ----------------------------------------------------------------------------
def _pick_tile(total, target):
    """Largest tile t <= target with total % t == 0 and t a multiple of 8."""
    if total <= target:
        return total
    for t in range(target, 7, -1):
        if total % t == 0 and t % 8 == 0:
            return t
    # TODO(synk): pad HW / mask a partial last tile instead of this whole-axis
    # fallback for very large HW with no multiple-of-8 divisor <= target.
    return total


def _vmem_limit_bytes():
    """Generation-aware scoped-VMEM limit (v5e/v6e: 128 MiB physical, v7x: 64 MiB)."""
    try:
        kind = jax.devices()[0].device_kind.lower()
    except Exception:
        kind = ""
    if "v5" in kind or "v6" in kind:
        return 100 * 1024 * 1024
    return 48 * 1024 * 1024  # conservative for v7x / unknown chips


# ----------------------------------------------------------------------------
# Stage 1a: tiled GroupNorm statistics -> per-image per-channel scale/shift
# ----------------------------------------------------------------------------
def _gn_stats_kernel(
    x_ref,       # (1, TR, C) f32 input row tile
    gmat_ref,    # (C, C)     f32 group-averaging matrix (1/(HW*gs) within group)
    gamma_ref,   # (1, C)     f32 GroupNorm weight
    beta_ref,    # (1, C)     f32 GroupNorm bias
    scale_ref,   # (1, 1, C)  f32 out: gamma * rsqrt(var + eps)
    shift_ref,   # (1, 1, C)  f32 out: beta - mean * scale
    sum_sc,      # (1, C)     f32 scratch: running per-channel sum
    sq_sc,       # (1, C)     f32 scratch: running per-channel sum of squares
    *,
    eps: float,
):
    ri = pl.program_id(1)

    @pl.when(ri == 0)
    def _():
        sum_sc[...] = jnp.zeros_like(sum_sc)
        sq_sc[...] = jnp.zeros_like(sq_sc)

    x = x_ref[0]                                               # (TR, C) f32
    sum_sc[...] += jnp.sum(x, axis=0, keepdims=True)           # (1, C)
    sq_sc[...] += jnp.sum(x * x, axis=0, keepdims=True)        # (1, C)

    @pl.when(ri == pl.num_programs(1) - 1)
    def _():
        # Single-pass group statistics: E[x^2] - E[x]^2 (per review).
        mean = jnp.dot(sum_sc[...], gmat_ref[...],
                       preferred_element_type=jnp.float32)     # (1, C)
        ex2 = jnp.dot(sq_sc[...], gmat_ref[...],
                      preferred_element_type=jnp.float32)      # (1, C)
        var = ex2 - mean * mean
        inv = lax.rsqrt(var + eps)
        scale = gamma_ref[...] * inv
        scale_ref[0] = scale
        shift_ref[0] = beta_ref[...] - mean * scale


# ----------------------------------------------------------------------------
# Stage 1b: tiled normalize + fused QKV projection (scale folded into q)
# ----------------------------------------------------------------------------
def _norm_qkv_kernel(
    x_ref,       # (1, TR, C)  f32 input row tile
    scale_ref,   # (1, 1, C)   f32 per-image GroupNorm scale
    shift_ref,   # (1, 1, C)   f32 per-image GroupNorm shift
    wqkv_ref,    # (C, 3C)     bf16 fused q|k|v weight (pre-transposed, q pre-scaled)
    bqkv_ref,    # (1, 3C)     f32  fused q|k|v bias (q pre-scaled)
    q_ref,       # (1, TR, C)  bf16 out
    k_ref,       # (1, TR, C)  bf16 out
    v_ref,       # (1, TR, C)  bf16 out
):
    C = q_ref.shape[-1]
    xn = x_ref[0] * scale_ref[0] + shift_ref[0]                # (TR, C) f32
    qkv = jnp.dot(xn.astype(jnp.bfloat16), wqkv_ref[...],
                  preferred_element_type=jnp.float32) + bqkv_ref[...]  # (TR, 3C) f32
    q_ref[0] = qkv[:, 0 * C:1 * C].astype(jnp.bfloat16)
    k_ref[0] = qkv[:, 1 * C:2 * C].astype(jnp.bfloat16)
    v_ref[0] = qkv[:, 2 * C:3 * C].astype(jnp.bfloat16)


# ----------------------------------------------------------------------------
# Stage 2: flash attention + output projection + residual
# ----------------------------------------------------------------------------
def _flash_attn_proj_kernel(
    x_ref,       # (1, TQ, C)  f32 raw input q-tile (residual recomputed from it)
    scale_ref,   # (1, 1, C)   f32 per-image GroupNorm scale
    shift_ref,   # (1, 1, C)   f32 per-image GroupNorm shift
    q_ref,       # (1, TQ, C)  bf16 (attention scale already folded in)
    k_ref,       # (1, TK, C)  bf16
    v_ref,       # (1, TK, C)  bf16
    wp_ref,      # (C, C)      bf16 proj weight (pre-transposed)
    bp_ref,      # (1, C)      f32  proj bias
    o_ref,       # (1, TQ, C)  f32 out
    m_sc,        # (TQ, 1)     f32 scratch: running max
    l_sc,        # (TQ, 1)     f32 scratch: running sum
    acc_sc,      # (TQ, C)     f32 scratch: running weighted V
):
    ki = pl.program_id(2)

    @pl.when(ki == 0)
    def _():
        m_sc[...] = jnp.full_like(m_sc, -jnp.inf)
        l_sc[...] = jnp.zeros_like(l_sc)
        acc_sc[...] = jnp.zeros_like(acc_sc)

    q = q_ref[0]                                               # (TQ, C) bf16
    k = k_ref[0]                                               # (TK, C) bf16
    v = v_ref[0]                                               # (TK, C) bf16

    # q @ k^T without materializing a transpose (contract last dims of both).
    # No "* scale" here: C**-0.5 is folded into the q weights on the host.
    s = lax.dot_general(q, k, (((1,), (1,)), ((), ())),
                        preferred_element_type=jnp.float32)    # (TQ, TK) f32

    # Online softmax (f32 running stats).
    m_prev = m_sc[...]
    m_new = jnp.maximum(m_prev, jnp.max(s, axis=-1, keepdims=True))
    alpha = jnp.exp(m_prev - m_new)
    p = jnp.exp(s - m_new)                                     # (TQ, TK) f32
    l_sc[...] = alpha * l_sc[...] + jnp.sum(p, axis=-1, keepdims=True)
    acc_sc[...] = alpha * acc_sc[...] + jnp.dot(
        p.astype(jnp.bfloat16), v, preferred_element_type=jnp.float32)
    m_sc[...] = m_new

    @pl.when(ki == pl.num_programs(2) - 1)
    def _():
        inv_l = pl.reciprocal(l_sc[...], approx=True)          # EUP slot, ~free
        h = (acc_sc[...] * inv_l).astype(jnp.bfloat16)         # (TQ, C) bf16
        proj = jnp.dot(h, wp_ref[...],
                       preferred_element_type=jnp.float32) + bp_ref[...]
        # Residual = normalized x (matches `x = self.norm(x)` in the module),
        # recomputed in f32 from the raw input tile -> no xn HBM intermediate.
        resid = x_ref[0] * scale_ref[0] + shift_ref[0]
        o_ref[0] = (resid + proj).astype(o_ref.dtype)


# ----------------------------------------------------------------------------
# Wrapper
# ----------------------------------------------------------------------------
def attention_block_pallas(x_nchw, params, num_groups, eps=1e-5,
                           tq=256, tk=None, tr=512):
    """params: dict with gamma, beta, wq, bq, wk, bk, wv, bv, wp, bp (PyTorch conventions)."""
    B, C, H, W = x_nchw.shape
    HW = H * W
    gs = C // num_groups
    attn_scale = float(C) ** (-0.5)

    # NCHW -> (B, HW, C): channels on the lane axis so 1x1 convs are MXU matmuls.
    # TODO(synk): these two wrapper transposes are full-tensor HBM round trips;
    # when this block is embedded in the full VAE, keep activations channels-last
    # across the surrounding model (or fuse the layout change into neighbouring
    # ops) so they disappear.
    x = jnp.transpose(x_nchw.reshape(B, C, HW), (0, 2, 1)).astype(jnp.float32)

    # ---- tile sizes ----
    TR = _pick_tile(HW, tr)                  # Stage 1 row tile
    TQ = _pick_tile(HW, tq)                  # Stage 2 query tile
    if tk is None:
        # Grow TK toward HW (single k pass) while keeping double-buffered bf16
        # k+v tiles <= ~16 MiB and f32 scores/probs <= ~16 MiB (fits v7x VMEM).
        kv_cap = (16 * 1024 * 1024) // (8 * C)
        score_cap = (8 * 1024 * 1024) // (4 * TQ)
        tk = max(256, min(kv_cap, score_cap))
    TK = _pick_tile(HW, tk)
    nR, nQ, nK = HW // TR, HW // TQ, HW // TK

    vmem_limit = _vmem_limit_bytes()

    # ---- parameters ----
    gid = jnp.arange(C) // gs
    gmat = (gid[:, None] == gid[None, :]).astype(jnp.float32) / float(HW * gs)
    gamma = params["gamma"].reshape(1, C).astype(jnp.float32)
    beta = params["beta"].reshape(1, C).astype(jnp.float32)

    # Fused q|k|v weight (pre-transposed so kernel does xn @ W^T) in bf16, with
    # the attention scale folded into the q projection; f32 fused bias.
    wqkvT = jnp.concatenate(
        [params["wq"].T * attn_scale, params["wk"].T, params["wv"].T], axis=1
    ).astype(jnp.bfloat16)                                     # (C, 3C)
    bqkv = jnp.concatenate(
        [params["bq"] * attn_scale, params["bk"], params["bv"]], axis=0
    ).reshape(1, 3 * C).astype(jnp.float32)                    # (1, 3C)
    wpT = params["wp"].T.astype(jnp.bfloat16)                  # (C, C)
    bp = params["bp"].reshape(1, C).astype(jnp.float32)

    # ---------------- Stage 1a: tiled GroupNorm statistics ----------------
    row_tile = pl.BlockSpec((1, TR, C), lambda b, r: (b, r, 0))
    per_img_cs = pl.BlockSpec((1, 1, C), lambda b, r: (b, 0, 0))

    gn_scale, gn_shift = pl.pallas_call(
        functools.partial(_gn_stats_kernel, eps=eps),
        out_shape=(jax.ShapeDtypeStruct((B, 1, C), jnp.float32),
                   jax.ShapeDtypeStruct((B, 1, C), jnp.float32)),
        grid_spec=pltpu.PrefetchScalarGridSpec(
            num_scalar_prefetch=0,
            grid=(B, nR),
            in_specs=[
                row_tile,
                pl.BlockSpec((C, C), lambda b, r: (0, 0)),     # gmat
                pl.BlockSpec((1, C), lambda b, r: (0, 0)),     # gamma
                pl.BlockSpec((1, C), lambda b, r: (0, 0)),     # beta
            ],
            out_specs=[per_img_cs, per_img_cs],
            scratch_shapes=[pltpu.VMEM((1, C), jnp.float32),
                            pltpu.VMEM((1, C), jnp.float32)],
        ),
        compiler_params=pltpu.CompilerParams(
            dimension_semantics=("parallel", "arbitrary"),
            vmem_limit_bytes=vmem_limit),
    )(x, gmat, gamma, beta)

    # ---------------- Stage 1b: tiled normalize + fused QKV ----------------
    q, k, v = pl.pallas_call(
        _norm_qkv_kernel,
        out_shape=(jax.ShapeDtypeStruct((B, HW, C), jnp.bfloat16),
                   jax.ShapeDtypeStruct((B, HW, C), jnp.bfloat16),
                   jax.ShapeDtypeStruct((B, HW, C), jnp.bfloat16)),
        grid_spec=pltpu.PrefetchScalarGridSpec(
            num_scalar_prefetch=0,
            grid=(B, nR),
            in_specs=[
                row_tile,                                      # x
                per_img_cs,                                    # gn_scale
                per_img_cs,                                    # gn_shift
                pl.BlockSpec((C, 3 * C), lambda b, r: (0, 0)), # wqkvT
                pl.BlockSpec((1, 3 * C), lambda b, r: (0, 0)), # bqkv
            ],
            out_specs=[row_tile, row_tile, row_tile],
        ),
        compiler_params=pltpu.CompilerParams(
            dimension_semantics=("parallel", "parallel"),
            vmem_limit_bytes=vmem_limit),
    )(x, gn_scale, gn_shift, wqkvT, bqkv)

    # ------------ Stage 2: flash attention + proj + residual ------------
    q_tile = pl.BlockSpec((1, TQ, C), lambda b, qi, ki: (b, qi, 0))
    kv_tile = pl.BlockSpec((1, TK, C), lambda b, qi, ki: (b, ki, 0))
    per_img_cs3 = pl.BlockSpec((1, 1, C), lambda b, qi, ki: (b, 0, 0))

    out = pl.pallas_call(
        _flash_attn_proj_kernel,
        out_shape=jax.ShapeDtypeStruct((B, HW, C), jnp.float32),
        grid_spec=pltpu.PrefetchScalarGridSpec(
            num_scalar_prefetch=0,
            grid=(B, nQ, nK),
            in_specs=[
                q_tile,                                        # x (residual recompute)
                per_img_cs3,                                   # gn_scale
                per_img_cs3,                                   # gn_shift
                q_tile,                                        # q
                kv_tile,                                       # k
                kv_tile,                                       # v
                pl.BlockSpec((C, C), lambda b, qi, ki: (0, 0)),   # wpT
                pl.BlockSpec((1, C), lambda b, qi, ki: (0, 0)),   # bp
            ],
            out_specs=q_tile,
            scratch_shapes=[
                pltpu.VMEM((TQ, 1), jnp.float32),   # running max
                pltpu.VMEM((TQ, 1), jnp.float32),   # running sum
                pltpu.VMEM((TQ, C), jnp.float32),   # accumulator
            ],
        ),
        compiler_params=pltpu.CompilerParams(
            dimension_semantics=("parallel", "parallel", "arbitrary"),
            vmem_limit_bytes=vmem_limit),
    )(x, gn_scale, gn_shift, q, k, v, wpT, bp)

    # (B, HW, C) -> NCHW
    return jnp.transpose(out, (0, 2, 1)).reshape(B, C, H, W)


# ----------------------------------------------------------------------------
# Pure-JAX reference mirroring the PyTorch forward exactly
# ----------------------------------------------------------------------------
def attention_block_ref(x, params, num_groups, eps=1e-5):
    B, C, H, W = x.shape
    gs = C // num_groups
    xg = x.reshape(B, num_groups, gs, H, W)
    mean = xg.mean(axis=(2, 3, 4), keepdims=True)
    var = xg.var(axis=(2, 3, 4), keepdims=True)
    xn = ((xg - mean) / jnp.sqrt(var + eps)).reshape(B, C, H, W)
    xn = xn * params["gamma"][None, :, None, None] + params["beta"][None, :, None, None]

    def conv1x1(z, w, b):
        return jnp.einsum("bchw,oc->bohw", z, w) + b[None, :, None, None]

    q = conv1x1(xn, params["wq"], params["bq"]).reshape(B, C, H * W).transpose(0, 2, 1)
    k = conv1x1(xn, params["wk"], params["bk"]).reshape(B, C, H * W)
    v = conv1x1(xn, params["wv"], params["bv"]).reshape(B, C, H * W).transpose(0, 2, 1)
    attn = jnp.einsum("bnc,bcm->bnm", q, k) * float(C) ** (-0.5)
    attn = jax.nn.softmax(attn, axis=-1)
    h = jnp.einsum("bnm,bmc->bnc", attn, v).transpose(0, 2, 1).reshape(B, C, H, W)
    return xn + conv1x1(h, params["wp"], params["bp"])


if __name__ == "__main__":
    B, C, H, W = 2, 64, 16, 16       # HW = 256 -> single q/k tile per image
    num_groups = 8

    key = jax.random.PRNGKey(0)
    keys = jax.random.split(key, 12)
    x = jax.random.normal(keys[0], (B, C, H, W), dtype=jnp.float32)

    # Deterministic synthetic parameters (shapes match nn.GroupNorm / nn.Conv2d(C, C, 1)).
    params = {
        "gamma": 1.0 + 0.1 * jax.random.normal(keys[1], (C,), dtype=jnp.float32),
        "beta": 0.1 * jax.random.normal(keys[2], (C,), dtype=jnp.float32),
        "wq": jax.random.normal(keys[3], (C, C), dtype=jnp.float32) / jnp.sqrt(C),
        "bq": 0.05 * jax.random.normal(keys[4], (C,), dtype=jnp.float32),
        "wk": jax.random.normal(keys[5], (C, C), dtype=jnp.float32) / jnp.sqrt(C),
        "bk": 0.05 * jax.random.normal(keys[6], (C,), dtype=jnp.float32),
        "wv": jax.random.normal(keys[7], (C, C), dtype=jnp.float32) / jnp.sqrt(C),
        "bv": 0.05 * jax.random.normal(keys[8], (C,), dtype=jnp.float32),
        "wp": jax.random.normal(keys[9], (C, C), dtype=jnp.float32) / jnp.sqrt(C),
        "bp": 0.05 * jax.random.normal(keys[10], (C,), dtype=jnp.float32),
    }

    out = attention_block_pallas(x, params, num_groups)
    out = jax.block_until_ready(out)

    ref = attention_block_ref(x, params, num_groups)
    assert out.shape == (B, C, H, W)
    max_err = float(jnp.max(jnp.abs(out - ref)))
    # bf16 MXU operands + approx softmax reciprocal -> looser tolerance than pure f32.
    assert jnp.allclose(out, ref, rtol=5e-2, atol=5e-2), max_err

    print("KERNEL_OK")
</pallas_src>

<mosaic_0001>
module attributes {stable_mosaic.version = 11 : i64} {
  func.func @_gn_stats_kernel(%arg0: i32, %arg1: i32, %arg2: memref<1x256x64xf32, #tpu.memory_space<vmem>>, %arg3: memref<64x64xf32, #tpu.memory_space<vmem>>, %arg4: memref<1x64xf32, #tpu.memory_space<vmem>>, %arg5: memref<1x64xf32, #tpu.memory_space<vmem>>, %arg6: memref<1x1x64xf32, #tpu.memory_space<vmem>>, %arg7: memref<1x1x64xf32, #tpu.memory_space<vmem>>, %arg8: memref<1x64xf32, #tpu.memory_space<vmem>>, %arg9: memref<1x64xf32, #tpu.memory_space<vmem>>) attributes {dimension_semantics = [#tpu.dimension_semantics<parallel>, #tpu.dimension_semantics<arbitrary>], iteration_bounds = array<i64: 2, 1>, scalar_prefetch = 0 : i64, scratch_operands = 2 : i64, tpu.core_type = #tpu.core_type<tc>, window_params = [{transform_indices = @transform_0, window_bounds = array<i64: 1, 256, 64>}, {pipeline_mode = #tpu.pipeline_mode<synchronous>, transform_indices = @transform_1, window_bounds = array<i64: 64, 64>}, {pipeline_mode = #tpu.pipeline_mode<synchronous>, transform_indices = @transform_2, window_bounds = array<i64: 1, 64>}, {pipeline_mode = #tpu.pipeline_mode<synchronous>, transform_indices = @transform_3, window_bounds = array<i64: 1, 64>}, {transform_indices = @transform_4, window_bounds = array<i64: 1, 1, 64>}, {transform_indices = @transform_5, window_bounds = array<i64: 1, 1, 64>}]} {
    %c0_i32 = arith.constant 0 : i32
    %0 = arith.cmpi eq, %arg1, %c0_i32 : i32
    %1 = arith.extui %0 : i1 to i32
    %c0_i32_0 = arith.constant 0 : i32
    %2 = arith.cmpi ne, %1, %c0_i32_0 : i32
    scf.if %2 {
      %cst_14 = arith.constant 0.000000e+00 : f32
      %19 = vector.broadcast %cst_14 : f32 to vector<1x64xf32>
      %c0_15 = arith.constant 0 : index
      %c0_16 = arith.constant 0 : index
      %20 = vector.load %arg8[%c0_15, %c0_16] : memref<1x64xf32, #tpu.memory_space<vmem>>, vector<1x64xf32>
      tpu.vector_store %arg8[%c0_15, %c0_16], %19 {strides = array<i32>} : memref<1x64xf32, #tpu.memory_space<vmem>>, vector<1x64xf32>,
      %cst_17 = arith.constant 0.000000e+00 : f32
      %21 = vector.broadcast %cst_17 : f32 to vector<1x64xf32>
      %c0_18 = arith.constant 0 : index
      %c0_19 = arith.constant 0 : index
      %22 = vector.load %arg9[%c0_18, %c0_19] : memref<1x64xf32, #tpu.memory_space<vmem>>, vector<1x64xf32>
      tpu.vector_store %arg9[%c0_18, %c0_19], %21 {strides = array<i32>} : memref<1x64xf32, #tpu.memory_space<vmem>>, vector<1x64xf32>,
    } else {
    }
    %c0 = arith.constant 0 : index
    %c0_1 = arith.constant 0 : index
    %c0_2 = arith.constant 0 : index
    %3 = vector.load %arg2[%c0, %c0_1, %c0_2] : memref<1x256x64xf32, #tpu.memory_space<vmem>>, vector<1x256x64xf32>
    %4 = vector.shape_cast %3 : vector<1x256x64xf32> to vector<256x64xf32>
    %c0_3 = arith.constant 0 : index
    %c0_4 = arith.constant 0 : index
    %5 = vector.load %arg8[%c0_3, %c0_4] : memref<1x64xf32, #tpu.memory_space<vmem>>, vector<1x64xf32>
    %cst = arith.constant dense<0.000000e+00> : vector<64xf32>
    %6 = vector.multi_reduction <add>, %4, %cst [0] : vector<256x64xf32> to vector<64xf32>
    %7 = vector.shape_cast %6 : vector<64xf32> to vector<1x64xf32>
    %8 = arith.addf %5, %7 : vector<1x64xf32>
    %c0_5 = arith.constant 0 : index
    %c0_6 = arith.constant 0 : index
    %9 = vector.load %arg8[%c0_5, %c0_6] : memref<1x64xf32, #tpu.memory_space<vmem>>, vector<1x64xf32>
    tpu.vector_store %arg8[%c0_5, %c0_6], %8 {strides = array<i32>} : memref<1x64xf32, #tpu.memory_space<vmem>>, vector<1x64xf32>,
    %c0_7 = arith.constant 0 : index
    %c0_8 = arith.constant 0 : index
    %10 = vector.load %arg9[%c0_7, %c0_8] : memref<1x64xf32, #tpu.memory_space<vmem>>, vector<1x64xf32>
    %11 = arith.mulf %4, %4 : vector<256x64xf32>
    %cst_9 = arith.constant dense<0.000000e+00> : vector<64xf32>
    %12 = vector.multi_reduction <add>, %11, %cst_9 [0] : vector<256x64xf32> to vector<64xf32>
    %13 = vector.shape_cast %12 : vector<64xf32> to vector<1x64xf32>
    %14 = arith.addf %10, %13 : vector<1x64xf32>
    %c0_10 = arith.constant 0 : index
    %c0_11 = arith.constant 0 : index
    %15 = vector.load %arg9[%c0_10, %c0_11] : memref<1x64xf32, #tpu.memory_space<vmem>>, vector<1x64xf32>
    tpu.vector_store %arg9[%c0_10, %c0_11], %14 {strides = array<i32>} : memref<1x64xf32, #tpu.memory_space<vmem>>, vector<1x64xf32>,
    %c0_i32_12 = arith.constant 0 : i32
    %16 = arith.cmpi eq, %arg1, %c0_i32_12 : i32
    %17 = arith.extui %16 : i1 to i32
    %c0_i32_13 = arith.constant 0 : i32
    %18 = arith.cmpi ne, %17, %c0_i32_13 : i32
    scf.if %18 {
      %c0_14 = arith.constant 0 : index
      %c0_15 = arith.constant 0 : index
      %19 = vector.load %arg8[%c0_14, %c0_15] : memref<1x64xf32, #tpu.memory_space<vmem>>, vector<1x64xf32>
      %c0_16 = arith.constant 0 : index
      %c0_17 = arith.constant 0 : index
      %20 = vector.load %arg3[%c0_16, %c0_17] : memref<64x64xf32, #tpu.memory_space<vmem>>, vector<64x64xf32>
      %cst_18 = arith.constant dense<0.000000e+00> : vector<1x64xf32>
      %21 = tpu.matmul %19, %20, %cst_18 {dimension_numbers = #tpu.dot_dimension_numbers<[1], [0], [0], [1], [0, 0, 1, 1], [], []>} : vector<1x64xf32>, vector<64x64xf32>, vector<1x64xf32> -> vector<1x64xf32>
      %c0_19 = arith.constant 0 : index
      %c0_20 = arith.constant 0 : index
      %22 = vector.load %arg9[%c0_19, %c0_20] : memref<1x64xf32, #tpu.memory_space<vmem>>, vector<1x64xf32>
      %c0_21 = arith.constant 0 : index
      %c0_22 = arith.constant 0 : index
      %23 = vector.load %arg3[%c0_21, %c0_22] : memref<64x64xf32, #tpu.memory_space<vmem>>, vector<64x64xf32>
      %cst_23 = arith.constant dense<0.000000e+00> : vector<1x64xf32>
      %24 = tpu.matmul %22, %23, %cst_23 {dimension_numbers = #tpu.dot_dimension_numbers<[1], [0], [0], [1], [0, 0, 1, 1], [], []>} : vector<1x64xf32>, vector<64x64xf32>, vector<1x64xf32> -> vector<1x64xf32>
      %25 = arith.mulf %21, %21 : vector<1x64xf32>
      %26 = arith.subf %24, %25 : vector<1x64xf32>
      %cst_24 = arith.constant 9.99999974E-6 : f32
      %27 = vector.broadcast %cst_24 : f32 to vector<1x64xf32>
      %28 = arith.addf %26, %27 : vector<1x64xf32>
      %29 = math.rsqrt %28 : vector<1x64xf32>
      %c0_25 = arith.constant 0 : index
      %c0_26 = arith.constant 0 : index
      %30 = vector.load %arg4[%c0_25, %c0_26] : memref<1x64xf32, #tpu.memory_space<vmem>>, vector<1x64xf32>
      %31 = arith.mulf %30, %29 : vector<1x64xf32>
      %c0_27 = arith.constant 0 : index
      %c0_28 = arith.constant 0 : index
      %c0_29 = arith.constant 0 : index
      %32 = vector.load %arg6[%c0_27, %c0_28, %c0_29] : memref<1x1x64xf32, #tpu.memory_space<vmem>>, vector<1x1x64xf32>
      %33 = vector.shape_cast %32 : vector<1x1x64xf32> to vector<1x64xf32>
      %34 = vector.shape_cast %31 : vector<1x64xf32> to vector<1x1x64xf32>
      tpu.vector_store %arg6[%c0_27, %c0_28, %c0_29], %34 {strides = array<i32>} : memref<1x1x64xf32, #tpu.memory_space<vmem>>, vector<1x1x64xf32>,
      %c0_30 = arith.constant 0 : index
      %c0_31 = arith.constant 0 : index
      %35 = vector.load %arg5[%c0_30, %c0_31] : memref<1x64xf32, #tpu.memory_space<vmem>>, vector<1x64xf32>
      %36 = arith.mulf %21, %31 : vector<1x64xf32>
      %37 = arith.subf %35, %36 : vector<1x64xf32>
      %c0_32 = arith.constant 0 : index
      %c0_33 = arith.constant 0 : index
      %c0_34 = arith.constant 0 : index
      %38 = vector.load %arg7[%c0_32, %c0_33, %c0_34] : memref<1x1x64xf32, #tpu.memory_space<vmem>>, vector<1x1x64xf32>
      %39 = vector.shape_cast %38 : vector<1x1x64xf32> to vector<1x64xf32>
      %40 = vector.shape_cast %37 : vector<1x64xf32> to vector<1x1x64xf32>
      tpu.vector_store %arg7[%c0_32, %c0_33, %c0_34], %40 {strides = array<i32>} : memref<1x1x64xf32, #tpu.memory_space<vmem>>, vector<1x1x64xf32>,
    } else {
    }
    return
  }
  func.func @transform_0(%arg0: i32, %arg1: i32) -> (i32, i32, i32) {
    %c0_i32 = arith.constant 0 : i32
    %c0_i32_0 = arith.constant 0 : i32
    return %arg0, %arg1, %c0_i32 : i32, i32, i32
  }
  func.func @transform_1(%arg0: i32, %arg1: i32) -> (i32, i32) {
    %c0_i32 = arith.constant 0 : i32
    %c0_i32_0 = arith.constant 0 : i32
    %c0_i32_1 = arith.constant 0 : i32
    return %c0_i32, %c0_i32_0 : i32, i32
  }
  func.func @transform_2(%arg0: i32, %arg1: i32) -> (i32, i32) {
    %c0_i32 = arith.constant 0 : i32
    %c0_i32_0 = arith.constant 0 : i32
    %c0_i32_1 = arith.constant 0 : i32
    return %c0_i32, %c0_i32_0 : i32, i32
  }
  func.func @transform_3(%arg0: i32, %arg1: i32) -> (i32, i32) {
    %c0_i32 = arith.constant 0 : i32
    %c0_i32_0 = arith.constant 0 : i32
    %c0_i32_1 = arith.constant 0 : i32
    return %c0_i32, %c0_i32_0 : i32, i32
  }
  func.func @transform_4(%arg0: i32, %arg1: i32) -> (i32, i32, i32) {
    %c0_i32 = arith.constant 0 : i32
    %c0_i32_0 = arith.constant 0 : i32
    %c0_i32_1 = arith.constant 0 : i32
    return %arg0, %c0_i32, %c0_i32_0 : i32, i32, i32
  }
  func.func @transform_5(%arg0: i32, %arg1: i32) -> (i32, i32, i32) {
    %c0_i32 = arith.constant 0 : i32
    %c0_i32_0 = arith.constant 0 : i32
    %c0_i32_1 = arith.constant 0 : i32
    return %arg0, %c0_i32, %c0_i32_0 : i32, i32, i32
  }
}

</mosaic_0001>

<llo_original>
// kernel: tpu_custom_call.1
$region0: #{tpu_custom_call.1}
  #allocation0 [shape = 'u32[]', space=smem, size = 0x4, offset = 0x4, fixed_abs, tag = 'smem constant byte address 0x4 - core index']
  #allocation1 [shape = 'u32[72,128]{1,0:T(1,128)}', space=vmem, size = 0x9000, scoped, tag = 'internal scratch']
  #allocation2 [shape = 'f32[1,64]{1,0:T(1,128)}', space=vmem, size = 0x200, scoped, tag = 'scratch operand']
  #allocation3 [shape = 'f32[1,64]{1,0:T(1,128)}', space=vmem, size = 0x200, scoped, tag = 'scratch operand']
  %s0 = inlined_call_operand.vmem [shape: f32[2,256,64], index: 0, kind: input, shape index: {}]
  %s1 = inlined_call_operand.vmem [shape: f32[64,64], index: 1, kind: input, shape index: {}]
  %s2 = inlined_call_operand.vmem [shape: f32[1,64], index: 2, kind: input, shape index: {}]
  %s3 = inlined_call_operand.vmem [shape: f32[1,64], index: 3, kind: input, shape index: {}]
  %s4 = inlined_call_operand.hbm [shape: f32[2,1,64], index: 4, kind: output, shape index: {0}]
  %s5 = inlined_call_operand.hbm [shape: f32[2,1,64], index: 5, kind: output, shape index: {1}]
  %6 = xla_tuple %s4, %s5
  %s7 = sld [smem:[#allocation0]]
  $region65: #{tpu_custom_call.1} parent=0
    _
  %s9 = ssub.s32 1, %s7
  %s10 = scalar_select 0, %s9, %s7
  $region1: #{tpu_custom_call.1} parent=0
    #allocation4 [shape = 'u8[1024]{0}', space=vmem, size = 0x400, scoped, tag = 'output window, operand 0']
    #allocation5 [shape = 's32[2]{0}', space=sflag, size = 0x8, scoped, tag = 'scoped memory for tpu_custom_call.1']
    #allocation6 [shape = 'u8[1024]{0}', space=vmem, size = 0x400, scoped, tag = 'output window, operand 1']
    #allocation7 [shape = 's32[2]{0}', space=sflag, size = 0x8, scoped, tag = 'scoped memory for tpu_custom_call.1']
    %11 = vsyncpa [#allocation5], 0
    %s12 = scalar_lea.sflag [#allocation5], 1
    %13 = vsyncpa %s12, 0
    %14 = vsyncpa [#allocation7], 0
    %s15 = scalar_lea.sflag [#allocation7], 1
    %16 = vsyncpa %s15, 0
    loop: start=0, step=1, limit=4
    $region2: #{tpu_custom_call.1} parent=1 // loop_pre_header
      _
    $region3: #{tpu_custom_call.1} parent=1 // loop_header
      %s18 = sphi 0, %s22
      %p19 = scmp.ge.s32.totalorder %s18, 4
      %s25 = sphi 0, %s37
      %s26 = sphi 0, %s33
      %s27 = sphi 0, %s25
      %s28 = sphi 0, %s26
      %s29 = sphi 0, %s27
      %s30 = sphi 0, %s28
      %s42 = sphi 0, %s44
      %s45 = sphi 0, %s42
      %s46 = sphi 0, %s45
      %s62 = sphi 0, %s46
      %s66 = sphi 0, %s66
      %s68 = sphi 0, %s66
      %s69 = sphi 0, %s68
      %s83 = sphi 0, %s69
      %s87 = sphi 0, %s87
      %s89 = sphi 0, %s87
      %s90 = sphi 0, %s89
      %s104 = sphi 0, %s90
      %s108 = sphi 0, %s108
      %s110 = sphi 0, %s108
      %s111 = sphi 0, %s110
      %s125 = sphi 0, %s111
      %s131 = sphi 0, %s133
      %s134 = sphi 0, %s131
      %s135 = sphi 0, %s134
      %s151 = sphi 0, %s135
      %s157 = sphi 0, %s159
      %s160 = sphi 0, %s157
      %s161 = sphi 0, %s160
      %s177 = sphi 0, %s161
    $region4: #{tpu_custom_call.1} parent=1 // loop_header_branch
      %21 = sbr.rel (%p19) target = $region8
    $region5: #{tpu_custom_call.1} parent=1 // loop_body
      %s23 = ssub.s32 %s18, 1
      %s24 = ssub.s32 %s18, 2
      %s31 = sadd.s32 1, %s26
      %p32 = scmp.ge.s32.totalorder %s31, 1
      %s33 = scalar_select %p32, 0, %s31
      %s34 = sadd.s32 1, %s25
      %s35 = scalar_select %p32, %s34, %s25
      %p36 = scmp.ge.s32.totalorder %s35, 2
      %s37 = scalar_select %p36, 0, %s35
      %s38 = ssub.s32 %s25, %s37
      %s39 = ssub.s32 %s26, %s33
      %s40 = sor.u32 %s38, %s39
      %p41 = scmp.eq.s32.totalorder %s40, 0
      %s43 = sadd.s32 %s42, 1
      %s44 = scalar_select %p41, %s42, %s43
      %p47 = pneg %p41
      %p48 = scmp.eq.s32.totalorder %s18, 1
      %p49 = por %p47, %p48
      %p50 = scmp.ne.s32.totalorder %s42, %s45
      %p51 = scmp.eq.s32.totalorder %s18, 0
      %p52 = por %p50, %p51
      %p53 = scmp.ne.s32.totalorder %s42, %s45
      %p54 = scmp.eq.s32.totalorder %s23, 1
      %p55 = por %p53, %p54
      %p56 = scmp.ne.s32.totalorder %s45, %s46
      %p57 = scmp.eq.s32.totalorder %s23, 0
      %p58 = por %p56, %p57
      %p59 = scmp.ne.s32.totalorder %s45, %s46
      %p60 = scmp.eq.s32.totalorder %s24, 1
      %p61 = por %p59, %p60
      %p63 = scmp.ne.s32.totalorder %s46, %s62
      %p64 = scmp.eq.s32.totalorder %s24, 0
      %p65 = por %p63, %p64
      %s67 = sadd.s32 %s66, 1
      %p70 = scmp.eq.s32.totalorder %s18, 1
      %p71 = scmp.ne.s32.totalorder %s66, %s68
      %p72 = scmp.eq.s32.totalorder %s18, 0
      %p73 = por %p71, %p72
      %p74 = scmp.ne.s32.totalorder %s66, %s68
      %p75 = scmp.eq.s32.totalorder %s23, 1
      %p76 = por %p74, %p75
      %p77 = scmp.ne.s32.totalorder %s68, %s69
      %p78 = scmp.eq.s32.totalorder %s23, 0
      %p79 = por %p77, %p78
      %p80 = scmp.ne.s32.totalorder %s68, %s69
      %p81 = scmp.eq.s32.totalorder %s24, 1
      %p82 = por %p80, %p81
      %p84 = scmp.ne.s32.totalorder %s69, %s83
      %p85 = scmp.eq.s32.totalorder %s24, 0
      %p86 = por %p84, %p85
      %s88 = sadd.s32 %s87, 1
      %p91 = scmp.eq.s32.totalorder %s18, 1
      %p92 = scmp.ne.s32.totalorder %s87, %s89
      %p93 = scmp.eq.s32.totalorder %s18, 0
      %p94 = por %p92, %p93
      %p95 = scmp.ne.s32.totalorder %s87, %s89
      %p96 = scmp.eq.s32.totalorder %s23, 1
      %p97 = por %p95, %p96
      %p98 = scmp.ne.s32.totalorder %s89, %s90
      %p99 = scmp.eq.s32.totalorder %s23, 0
      %p100 = por %p98, %p99
      %p101 = scmp.ne.s32.totalorder %s89, %s90
      %p102 = scmp.eq.s32.totalorder %s24, 1
      %p103 = por %p101, %p102
      %p105 = scmp.ne.s32.totalorder %s90, %s104
      %p106 = scmp.eq.s32.totalorder %s24, 0
      %p107 = por %p105, %p106
      %s109 = sadd.s32 %s108, 1
      %p112 = scmp.eq.s32.totalorder %s18, 1
      %p113 = scmp.ne.s32.totalorder %s108, %s110
      %p114 = scmp.eq.s32.totalorder %s18, 0
      %p115 = por %p113, %p114
      %p116 = scmp.ne.s32.totalorder %s108, %s110
      %p117 = scmp.eq.s32.totalorder %s23, 1
      %p118 = por %p116, %p117
      %p119 = scmp.ne.s32.totalorder %s110, %s111
      %p120 = scmp.eq.s32.totalorder %s23, 0
      %p121 = por %p119, %p120
      %p122 = scmp.ne.s32.totalorder %s110, %s111
      %p123 = scmp.eq.s32.totalorder %s24, 1
      %p124 = por %p122, %p123
      %p126 = scmp.ne.s32.totalorder %s111, %s125
      %p127 = scmp.eq.s32.totalorder %s24, 0
      %p128 = por %p126, %p127
      %s129 = ssub.s32 %s25, %s37
      %p130 = scmp.eq.s32.totalorder %s129, 0
      %s132 = sadd.s32 %s131, 1
      %s133 = scalar_select %p130, %s131, %s132
      %p136 = pneg %p130
      %p137 = scmp.eq.s32.totalorder %s18, 1
      %p138 = por %p136, %p137
      %p139 = scmp.ne.s32.totalorder %s131, %s134
      %p140 = scmp.eq.s32.totalorder %s18, 0
      %p141 = por %p139, %p140
      %p142 = scmp.ne.s32.totalorder %s131, %s134
      %p143 = scmp.eq.s32.totalorder %s23, 1
      %p144 = por %p142, %p143
      %p145 = scmp.ne.s32.totalorder %s134, %s135
      %p146 = scmp.eq.s32.totalorder %s23, 0
      %p147 = por %p145, %p146
      %p148 = scmp.ne.s32.totalorder %s134, %s135
      %p149 = scmp.eq.s32.totalorder %s24, 1
      %p150 = por %p148, %p149
      %p152 = scmp.ne.s32.totalorder %s135, %s151
      %p153 = scmp.eq.s32.totalorder %s24, 0
      %p154 = por %p152, %p153
      %s155 = ssub.s32 %s25, %s37
      %p156 = scmp.eq.s32.totalorder %s155, 0
      %s158 = sadd.s32 %s157, 1
      %s159 = scalar_select %p156, %s157, %s158
      %p162 = pneg %p156
      %p163 = scmp.eq.s32.totalorder %s18, 1
      %p164 = por %p162, %p163
      %p165 = scmp.ne.s32.totalorder %s157, %s160
      %p166 = scmp.eq.s32.totalorder %s18, 0
      %p167 = por %p165, %p166
      %p168 = scmp.ne.s32.totalorder %s157, %s160
      %p169 = scmp.eq.s32.totalorder %s23, 1
      %p170 = por %p168, %p169
      %p171 = scmp.ne.s32.totalorder %s160, %s161
      %p172 = scmp.eq.s32.totalorder %s23, 0
      %p173 = por %p171, %p172
      %p174 = scmp.ne.s32.totalorder %s160, %s161
      %p175 = scmp.eq.s32.totalorder %s24, 1
      %p176 = por %p174, %p175
      %p178 = scmp.ne.s32.totalorder %s161, %s177
      %p179 = scmp.eq.s32.totalorder %s24, 0
      %p180 = por %p178, %p179
      %p181 = scmp.le.s32.totalorder 1, %s18
      %p182 = scmp.lt.s32.totalorder %s18, 3
      %p183 = pnand %p181, %p182
      %p184 = pneg %p183
      // Predicated region
      $region9: #{tpu_custom_call.1} parent=5 // pred_check
        _
      $region10: #{tpu_custom_call.1} parent=5 // pred_check_branch
        %186 = sbr.rel (%p183) target = $region12
      $region11: #{tpu_custom_call.1} parent=5 // pred_region
        %s187 = ssub.s32 %s18, 1
        // Predicated region
        $region13: #{tpu_custom_call.1} parent=11 // pred_check
          %p188 = pneg %p79
        $region14: #{tpu_custom_call.1} parent=11 // pred_check_branch
          %190 = sbr.rel (%p188) target = $region16
        $region15: #{tpu_custom_call.1} parent=11 // pred_region
          _
        $region16: #{tpu_custom_call.1} parent=11 // pred_fallthru
          _
        // Predicated region
        $region17: #{tpu_custom_call.1} parent=11 // pred_check
          %p191 = pneg %p100
        $region18: #{tpu_custom_call.1} parent=11 // pred_check_branch
          %193 = sbr.rel (%p191) target = $region20
        $region19: #{tpu_custom_call.1} parent=11 // pred_region
          _
        $region20: #{tpu_custom_call.1} parent=11 // pred_fallthru
          _
        // Predicated region
        $region21: #{tpu_custom_call.1} parent=11 // pred_check
          %p194 = pneg %p121
        $region22: #{tpu_custom_call.1} parent=11 // pred_check_branch
          %196 = sbr.rel (%p194) target = $region24
        $region23: #{tpu_custom_call.1} parent=11 // pred_region
          _
        $region24: #{tpu_custom_call.1} parent=11 // pred_fallthru
          _
      $region12: #{tpu_custom_call.1} parent=5 // pred_fallthru
        _
      %p197 = scmp.lt.s32.totalorder %s18, 2
      // Predicated region
      $region25: #{tpu_custom_call.1} parent=5 // pred_check
        %p198 = pneg %p197
      $region26: #{tpu_custom_call.1} parent=5 // pred_check_branch
        %200 = sbr.rel (%p198) target = $region28
      $region27: #{tpu_custom_call.1} parent=5 // pred_region
        // Predicated region
        $region29: #{tpu_custom_call.1} parent=27 // pred_check
          %p201 = pneg %p52
        $region30: #{tpu_custom_call.1} parent=27 // pred_check_branch
          %203 = sbr.rel (%p201) target = $region32
        $region31: #{tpu_custom_call.1} parent=27 // pred_region
          %s204 = smul.u32 32, %s26
          %p205 = scmp.lt.s32.totalorder %s25, 1
          %s206 = scalar_select %p205, %s25, 1
          %p207 = scmp.lt.s32.totalorder %s204, 31
          %s208 = scalar_select %p207, %s204, 31
          %s209 = smul.addr %s206, 32
          %s210 = sadd.s32 %s208, %s209
          %s211 = smul.addr %s210, 8
          %s212 = scalar_lea.vmem %s0, %s211
          %s213 = smul.u32 32, %s26
        $region32: #{tpu_custom_call.1} parent=27 // pred_fallthru
          _
      $region28: #{tpu_custom_call.1} parent=5 // pred_fallthru
        _
      %p214 = scmp.le.s32.totalorder 1, %s18
      %p215 = scmp.lt.s32.totalorder %s18, 3
      %p216 = pnand %p214, %p215
      %p217 = pneg %p216
      // Predicated region
      $region33: #{tpu_custom_call.1} parent=5 // pred_check
        _
      $region34: #{tpu_custom_call.1} parent=5 // pred_check_branch
        %219 = sbr.rel (%p216) target = $region36
      $region35: #{tpu_custom_call.1} parent=5 // pred_region
        %s220 = ssub.s32 %s18, 1
        %s221 = smul.u32 32, %s28
        %p222 = scmp.lt.s32.totalorder %s27, 1
        %s223 = scalar_select %p222, %s27, 1
        %p224 = scmp.lt.s32.totalorder %s221, 31
        %s225 = scalar_select %p224, %s221, 31
        %s226 = smul.addr %s223, 32
        %s227 = sadd.s32 %s225, %s226
        %s228 = smul.addr %s227, 8
        %s229 = scalar_lea.vmem %s0, %s228
        %p230 = pneg %p58
        %p231 = pneg %p55
        %p232 = pneg %p79
        %p233 = pneg %p76
        %p234 = pneg %p100
        %p235 = pneg %p97
        %p236 = pneg %p121
        %p237 = pneg %p118
        %p238 = pneg %p147
        %p239 = pneg %p144
        %s240 = sand.u32 %s134, 1
        %s241 = scalar_lea.sflag [#allocation5], %s240
        %s242 = sand.u32 %s134, 1
        %s243 = scalar_lea.vmem [#allocation4], %s242
        %p244 = pneg %p173
        %p245 = pneg %p170
        %s246 = sand.u32 %s160, 1
        %s247 = scalar_lea.sflag [#allocation7], %s246
        %s248 = sand.u32 %s160, 1
        %s249 = scalar_lea.vmem [#allocation6], %s248
        %s250 = smul.u32 32, %s28
        %p251 = scmp.lt.s32.totalorder %s27, 1
        %s252 = scalar_select %p251, %s27, 1
        %p253 = scmp.lt.s32.totalorder %s250, 31
        %s254 = scalar_select %p253, %s250, 31
        %s255 = smul.addr %s252, 32
        %s256 = sadd.s32 %s254, %s255
        %s257 = smul.addr %s256, 8
        %s258 = scalar_lea.vmem %s0, %s257
        %s259 = smul.u32 32, %s28
        %p260 = scmp.eq.s32.totalorder %s28, 0
        // Predicated region
        $region37: #{tpu_custom_call.1} parent=35 // pred_check
          %p261 = pneg %p260
        $region38: #{tpu_custom_call.1} parent=35 // pred_check_branch
          %263 = sbr.rel (%p261) target = $region40
        $region39: #{tpu_custom_call.1} parent=35 // pred_region
          %vm264 = vcmask 516096
          %265 = vst.msk [vmem:[#allocation2] sm:$0x1] %vm264, 0.0
          %266 = vst.msk [vmem:[#allocation3] sm:$0x1] %vm264, 0.0
        $region40: #{tpu_custom_call.1} parent=35 // pred_fallthru
          _
        %v267 = vld [vmem:[%s258] sm:$0xff]
        %v268 = vld [vmem:[%s258 + $0x8] sm:$0xff]
        %v269 = vld [vmem:[%s258 + $0x10] sm:$0xff]
        %v270 = vld [vmem:[%s258 + $0x18] sm:$0xff]
        %v271 = vld [vmem:[%s258 + $0x20] sm:$0xff]
        %v272 = vld [vmem:[%s258 + $0x28] sm:$0xff]
        %v273 = vld [vmem:[%s258 + $0x30] sm:$0xff]
        %v274 = vld [vmem:[%s258 + $0x38] sm:$0xff]
        %v275 = vld [vmem:[%s258 + $0x40] sm:$0xff]
        %v276 = vld [vmem:[%s258 + $0x48] sm:$0xff]
        %v277 = vld [vmem:[%s258 + $0x50] sm:$0xff]
        %v278 = vld [vmem:[%s258 + $0x58] sm:$0xff]
        %v279 = vld [vmem:[%s258 + $0x60] sm:$0xff]
        %v280 = vld [vmem:[%s258 + $0x68] sm:$0xff]
        %v281 = vld [vmem:[%s258 + $0x70] sm:$0xff]
        %v282 = vld [vmem:[%s258 + $0x78] sm:$0xff]
        %v283 = vld [vmem:[%s258 + $0x80] sm:$0xff]
        %v284 = vld [vmem:[%s258 + $0x88] sm:$0xff]
        %v285 = vld [vmem:[%s258 + $0x90] sm:$0xff]
        %v286 = vld [vmem:[%s258 + $0x98] sm:$0xff]
        %v287 = vld [vmem:[%s258 + $0xa0] sm:$0xff]
        %v288 = vld [vmem:[%s258 + $0xa8] sm:$0xff]
        %v289 = vld [vmem:[%s258 + $0xb0] sm:$0xff]
        %v290 = vld [vmem:[%s258 + $0xb8] sm:$0xff]
        %v291 = vld [vmem:[%s258 + $0xc0] sm:$0xff]
        %v292 = vld [vmem:[%s258 + $0xc8] sm:$0xff]
        %v293 = vld [vmem:[%s258 + $0xd0] sm:$0xff]
        %v294 = vld [vmem:[%s258 + $0xd8] sm:$0xff]
        %v295 = vld [vmem:[%s258 + $0xe0] sm:$0xff]
        %v296 = vld [vmem:[%s258 + $0xe8] sm:$0xff]
        %v297 = vld [vmem:[%s258 + $0xf0] sm:$0xff]
        %v298 = vld [vmem:[%s258 + $0xf8] sm:$0xff]
        %v299 = vld [vmem:[#allocation2] sm:$0x1]
        %vm300 = vcmask 523264
        %v301 = vsel %vm300, %v267, 0.0
        %v302 = vsel %vm300, %v268, 0.0
        %v303 = vadd.f32 %v301, %v302
        %v304 = vsel %vm300, %v269, 0.0
        %v305 = vadd.f32 %v303, %v304
        %v306 = vsel %vm300, %v270, 0.0
        %v307 = vadd.f32 %v305, %v306
        %v308 = vsel %vm300, %v271, 0.0
        %v309 = vadd.f32 %v307, %v308
        %v310 = vsel %vm300, %v272, 0.0
        %v311 = vadd.f32 %v309, %v310
        %v312 = vsel %vm300, %v273, 0.0
        %v313 = vadd.f32 %v311, %v312
        %v314 = vsel %vm300, %v274, 0.0
        %v315 = vadd.f32 %v313, %v314
        %v316 = vsel %vm300, %v275, 0.0
        %v317 = vadd.f32 %v315, %v316
        %v318 = vsel %vm300, %v276, 0.0
        %v319 = vadd.f32 %v317, %v318
        %v320 = vsel %vm300, %v277, 0.0
        %v321 = vadd.f32 %v319, %v320
        %v322 = vsel %vm300, %v278, 0.0
        %v323 = vadd.f32 %v321, %v322
        %v324 = vsel %vm300, %v279, 0.0
        %v325 = vadd.f32 %v323, %v324
        %v326 = vsel %vm300, %v280, 0.0
        %v327 = vadd.f32 %v325, %v326
        %v328 = vsel %vm300, %v281, 0.0
        %v329 = vadd.f32 %v327, %v328
        %v330 = vsel %vm300, %v282, 0.0
        %v331 = vadd.f32 %v329, %v330
        %v332 = vsel %vm300, %v283, 0.0
        %v333 = vadd.f32 %v331, %v332
        %v334 = vsel %vm300, %v284, 0.0
        %v335 = vadd.f32 %v333, %v334
        %v336 = vsel %vm300, %v285, 0.0
        %v337 = vadd.f32 %v335, %v336
        %v338 = vsel %vm300, %v286, 0.0
        %v339 = vadd.f32 %v337, %v338
        %v340 = vsel %vm300, %v287, 0.0
        %v341 = vadd.f32 %v339, %v340
        %v342 = vsel %vm300, %v288, 0.0
        %v343 = vadd.f32 %v341, %v342
        %v344 = vsel %vm300, %v289, 0.0
        %v345 = vadd.f32 %v343, %v344
        %v346 = vsel %vm300, %v290, 0.0
        %v347 = vadd.f32 %v345, %v346
        %v348 = vsel %vm300, %v291, 0.0
        %v349 = vadd.f32 %v347, %v348
        %v350 = vsel %vm300, %v292, 0.0
        %v351 = vadd.f32 %v349, %v350
        %v352 = vsel %vm300, %v293, 0.0
        %v353 = vadd.f32 %v351, %v352
        %v354 = vsel %vm300, %v294, 0.0
        %v355 = vadd.f32 %v353, %v354
        %v356 = vsel %vm300, %v295, 0.0
        %v357 = vadd.f32 %v355, %v356
        %v358 = vsel %vm300, %v296, 0.0
        %v359 = vadd.f32 %v357, %v358
        %v360 = vsel %vm300, %v297, 0.0
        %v361 = vadd.f32 %v359, %v360
        %v362 = vsel %vm300, %v298, 0.0
        %v363 = vadd.f32 %v361, %v362
        %v364 = vrot.slane %v363, 4
        %v365 = vadd.f32 %v363, %v364
        %v366 = vrot.slane %v365, 2
        %v367 = vadd.f32 %v365, %v366
        %v368 = vrot.slane %v367, 1
        %v369 = vadd.f32 %v367, %v368
        %v370 = vadd.f32 %v299, %v369
        %vm371 = vcmask 516096
        %372 = vst.msk [vmem:[#allocation2] sm:$0x1] %vm371, %v370
        %v373 = vld [vmem:[#allocation3] sm:$0x1]
        %v374 = vmul.f32 %v267, %v267
        %v375 = vmul.f32 %v268, %v268
        %v376 = vmul.f32 %v269, %v269
        %v377 = vmul.f32 %v270, %v270
        %v378 = vmul.f32 %v271, %v271
        %v379 = vmul.f32 %v272, %v272
        %v380 = vmul.f32 %v273, %v273
        %v381 = vmul.f32 %v274, %v274
        %v382 = vmul.f32 %v275, %v275
        %v383 = vmul.f32 %v276, %v276
        %v384 = vmul.f32 %v277, %v277
        %v385 = vmul.f32 %v278, %v278
        %v386 = vmul.f32 %v279, %v279
        %v387 = vmul.f32 %v280, %v280
        %v388 = vmul.f32 %v281, %v281
        %v389 = vmul.f32 %v282, %v282
        %v390 = vmul.f32 %v283, %v283
        %v391 = vmul.f32 %v284, %v284
        %v392 = vmul.f32 %v285, %v285
        %v393 = vmul.f32 %v286, %v286
        %v394 = vmul.f32 %v287, %v287
        %v395 = vmul.f32 %v288, %v288
        %v396 = vmul.f32 %v289, %v289
        %v397 = vmul.f32 %v290, %v290
        %v398 = vmul.f32 %v291, %v291
        %v399 = vmul.f32 %v292, %v292
        %v400 = vmul.f32 %v293, %v293
        %v401 = vmul.f32 %v294, %v294
        %v402 = vmul.f32 %v295, %v295
        %v403 = vmul.f32 %v296, %v296
        %v404 = vmul.f32 %v297, %v297
        %v405 = vmul.f32 %v298, %v298
        %v406 = vsel %vm300, %v374, 0.0
        %v407 = vsel %vm300, %v375, 0.0
        %v408 = vadd.f32 %v406, %v407
        %v409 = vsel %vm300, %v376, 0.0
        %v410 = vadd.f32 %v408, %v409
        %v411 = vsel %vm300, %v377, 0.0
        %v412 = vadd.f32 %v410, %v411
        %v413 = vsel %vm300, %v378, 0.0
        %v414 = vadd.f32 %v412, %v413
        %v415 = vsel %vm300, %v379, 0.0
        %v416 = vadd.f32 %v414, %v415
        %v417 = vsel %vm300, %v380, 0.0
        %v418 = vadd.f32 %v416, %v417
        %v419 = vsel %vm300, %v381, 0.0
        %v420 = vadd.f32 %v418, %v419
        %v421 = vsel %vm300, %v382, 0.0
        %v422 = vadd.f32 %v420, %v421
        %v423 = vsel %vm300, %v383, 0.0
        %v424 = vadd.f32 %v422, %v423
        %v425 = vsel %vm300, %v384, 0.0
        %v426 = vadd.f32 %v424, %v425
        %v427 = vsel %vm300, %v385, 0.0
        %v428 = vadd.f32 %v426, %v427
        %v429 = vsel %vm300, %v386, 0.0
        %v430 = vadd.f32 %v428, %v429
        %v431 = vsel %vm300, %v387, 0.0
        %v432 = vadd.f32 %v430, %v431
        %v433 = vsel %vm300, %v388, 0.0
        %v434 = vadd.f32 %v432, %v433
        %v435 = vsel %vm300, %v389, 0.0
        %v436 = vadd.f32 %v434, %v435
        %v437 = vsel %vm300, %v390, 0.0
        %v438 = vadd.f32 %v436, %v437
        %v439 = vsel %vm300, %v391, 0.0
        %v440 = vadd.f32 %v438, %v439
        %v441 = vsel %vm300, %v392, 0.0
        %v442 = vadd.f32 %v440, %v441
        %v443 = vsel %vm300, %v393, 0.0
        %v444 = vadd.f32 %v442, %v443
        %v445 = vsel %vm300, %v394, 0.0
        %v446 = vadd.f32 %v444, %v445
        %v447 = vsel %vm300, %v395, 0.0
        %v448 = vadd.f32 %v446, %v447
        %v449 = vsel %vm300, %v396, 0.0
        %v450 = vadd.f32 %v448, %v449
        %v451 = vsel %vm300, %v397, 0.0
        %v452 = vadd.f32 %v450, %v451
        %v453 = vsel %vm300, %v398, 0.0
        %v454 = vadd.f32 %v452, %v453
        %v455 = vsel %vm300, %v399, 0.0
        %v456 = vadd.f32 %v454, %v455
        %v457 = vsel %vm300, %v400, 0.0
        %v458 = vadd.f32 %v456, %v457
        %v459 = vsel %vm300, %v401, 0.0
        %v460 = vadd.f32 %v458, %v459
        %v461 = vsel %vm300, %v402, 0.0
        %v462 = vadd.f32 %v460, %v461
        %v463 = vsel %vm300, %v403, 0.0
        %v464 = vadd.f32 %v462, %v463
        %v465 = vsel %vm300, %v404, 0.0
        %v466 = vadd.f32 %v464, %v465
        %v467 = vsel %vm300, %v405, 0.0
        %v468 = vadd.f32 %v466, %v467
        %v469 = vrot.slane %v468, 4
        %v470 = vadd.f32 %v468, %v469
        %v471 = vrot.slane %v470, 2
        %v472 = vadd.f32 %v470, %v471
        %v473 = vrot.slane %v472, 1
        %v474 = vadd.f32 %v472, %v473
        %v475 = vadd.f32 %v373, %v474
        %476 = vst.msk [vmem:[#allocation3] sm:$0x1] %vm371, %v475
        // Predicated region
        $region41: #{tpu_custom_call.1} parent=35 // pred_check
          %p477 = pneg %p260
        $region42: #{tpu_custom_call.1} parent=35 // pred_check_branch
          %479 = sbr.rel (%p477) target = $region44
        $region43: #{tpu_custom_call.1} parent=35 // pred_region
          %v480 = vld [vmem:[#allocation2] sm:$0x1]
          %v481 = vld [vmem:[%s1] sm:$0xff]
          %v482 = vld [vmem:[%s1 + $0x8] sm:$0xff]
          %v483 = vld [vmem:[%s1 + $0x10] sm:$0xff]
          %v484 = vld [vmem:[%s1 + $0x18] sm:$0xff]
          %v485 = vld [vmem:[%s1 + $0x20] sm:$0xff]
          %v486 = vld [vmem:[%s1 + $0x28] sm:$0xff]
          %v487 = vld [vmem:[%s1 + $0x30] sm:$0xff]
          %v488 = vld [vmem:[%s1 + $0x38] sm:$0xff]
          %v490 = vsel %vm300, %v480, 0
          %492 = vmatpush.msra.mxu0 0.0
          %493 = vmatpush.msra.mxu0 0.0
          %494 = vmatpush.msra.mxu0 0.0
          %495 = vmatpush.msra.mxu0 0.0
          %496 = vmatpush.msra.mxu0 0.0
          %497 = vmatpush.msra.mxu0 0.0
          %498 = vmatpush.msra.mxu0 0.0
          %499 = vmatpush.msra.mxu0 0.0
          %500 = vmatpush.msra.mxu0 %v488
          %501 = vmatpush.msra.mxu0 %v487
          %502 = vmatpush.msra.mxu0 %v486
          %503 = vmatpush.msra.mxu0 %v485
          %504 = vmatpush.msra.mxu0 %v484
          %505 = vmatpush.msra.mxu0 %v483
          %506 = vmatpush.msra.mxu0 %v482
          %507 = vmatpush.msra.mxu0 %v481
          %508 = vmatmul.f32.gmra.mxu0 %v490
          %v509 = vpop.f32.mrf.mxu0
          %v510 = vadd.f32 0.0, %v509
          %511 = vdwg.mxu0
          %v512 = vld [vmem:[#allocation3] sm:$0x1]
          %v514 = vsel %vm300, %v512, 0
          %516 = vmatpush.msra.mxu0 0.0
          %517 = vmatpush.msra.mxu0 0.0
          %518 = vmatpush.msra.mxu0 0.0
          %519 = vmatpush.msra.mxu0 0.0
          %520 = vmatpush.msra.mxu0 0.0
          %521 = vmatpush.msra.mxu0 0.0
          %522 = vmatpush.msra.mxu0 0.0
          %523 = vmatpush.msra.mxu0 0.0
          %524 = vmatpush.msra.mxu0 %v488
          %525 = vmatpush.msra.mxu0 %v487
          %526 = vmatpush.msra.mxu0 %v486
          %527 = vmatpush.msra.mxu0 %v485
          %528 = vmatpush.msra.mxu0 %v484
          %529 = vmatpush.msra.mxu0 %v483
          %530 = vmatpush.msra.mxu0 %v482
          %531 = vmatpush.msra.mxu0 %v481
          %532 = vmatmul.f32.gmra.mxu0 %v514
          %v533 = vpop.f32.mrf.mxu0
          %v534 = vadd.f32 0.0, %v533
          %535 = vdwg.mxu0
          %v536 = vmul.f32 %v510, %v510
          %v537 = vsub.f32 %v534, %v536
          %v538 = vadd.f32 %v537, 1e-05
          %v539 = vrsqrt.pop %v538
          %v540 = vmul.f32 %v539, %v538
          %v541 = vmul.f32 %v540, %v539
          %v542 = vmul.f32 0.5, %v541
          %v543 = vsub.f32 1.5, %v542
          %v544 = vmul.f32 %v539, %v543
          %vm545 = vweird.f32 %v538
          %vm546 = vweird.f32 %v539
          %vm547 = vmor %vm545, %vm546
          %v548 = vsel %vm547, %v539, %v544
          %v549 = vld [vmem:[%s2] sm:$0x1]
          %v550 = vmul.f32 %v549, %v548
          %551 = vst.msk [vmem:[%s243] sm:$0x1] %vm371, %v550
          %v552 = vld [vmem:[%s3] sm:$0x1]
          %v553 = vmul.f32 %v510, %v550
          %v554 = vsub.f32 %v552, %v553
          %555 = vst.msk [vmem:[%s249] sm:$0x1] %vm371, %v554
        $region44: #{tpu_custom_call.1} parent=35 // pred_fallthru
          _
        %s556 = sand.u32 %s134, 1
        %s557 = scalar_lea.sflag [#allocation5], %s556
        %s558 = sand.u32 %s134, 1
        %s559 = scalar_lea.vmem [#allocation4], %s558
        %s560 = sand.u32 %s160, 1
        %s561 = scalar_lea.sflag [#allocation7], %s560
        %s562 = sand.u32 %s160, 1
        %s563 = scalar_lea.vmem [#allocation6], %s562
        // Predicated region
        $region45: #{tpu_custom_call.1} parent=35 // pred_check
          %p564 = pneg %p144
        $region46: #{tpu_custom_call.1} parent=35 // pred_check_branch
          %566 = sbr.rel (%p564) target = $region48
        $region47: #{tpu_custom_call.1} parent=35 // pred_region
          %568 = vsyncadd %s557, 0
          %s569 = scalar_lea.hbm %s4, %s27
          %s571 = sshll.u32 %s559, 4
          %s572 = int_to_ptr.vmem [resolvable:$true] %s571
          %s573 = sshll.u32 %s569, 4
          %s574 = int_to_ptr.hbm [resolvable:$true] %s573
          %576 = dma.vmem_to_hbm [thread:$0]  %s572, 16, %s574, %s557
        $region48: #{tpu_custom_call.1} parent=35 // pred_fallthru
          _
        // Predicated region
        $region49: #{tpu_custom_call.1} parent=35 // pred_check
          %p577 = pneg %p170
        $region50: #{tpu_custom_call.1} parent=35 // pred_check_branch
          %579 = sbr.rel (%p577) target = $region52
        $region51: #{tpu_custom_call.1} parent=35 // pred_region
          %581 = vsyncadd %s561, 0
          %s582 = scalar_lea.hbm %s5, %s27
          %s584 = sshll.u32 %s563, 4
          %s585 = int_to_ptr.vmem [resolvable:$true] %s584
          %s586 = sshll.u32 %s582, 4
          %s587 = int_to_ptr.hbm [resolvable:$true] %s586
          %589 = dma.vmem_to_hbm [thread:$0]  %s585, 16, %s587, %s561
        $region52: #{tpu_custom_call.1} parent=35 // pred_fallthru
          _
      $region36: #{tpu_custom_call.1} parent=5 // pred_fallthru
        _
      %p590 = scmp.le.s32.totalorder 2, %s18
      // Predicated region
      $region53: #{tpu_custom_call.1} parent=5 // pred_check
        %p591 = pneg %p590
      $region54: #{tpu_custom_call.1} parent=5 // pred_check_branch
        %593 = sbr.rel (%p591) target = $region56
      $region55: #{tpu_custom_call.1} parent=5 // pred_region
        %s594 = ssub.s32 %s18, 2
        // Predicated region
        $region57: #{tpu_custom_call.1} parent=55 // pred_check
          %p595 = pneg %p150
        $region58: #{tpu_custom_call.1} parent=55 // pred_check_branch
          %597 = sbr.rel (%p595) target = $region60
        $region59: #{tpu_custom_call.1} parent=55 // pred_region
          %s598 = sand.u32 %s135, 1
          %s599 = scalar_lea.sflag [#allocation5], %s598
          %s600 = sand.u32 %s135, 1
          %s601 = scalar_lea.vmem [#allocation4], %s600
          %603 = dma.done %s599, 16
        $region60: #{tpu_custom_call.1} parent=55 // pred_fallthru
          _
        // Predicated region
        $region61: #{tpu_custom_call.1} parent=55 // pred_check
          %p604 = pneg %p176
        $region62: #{tpu_custom_call.1} parent=55 // pred_check_branch
          %606 = sbr.rel (%p604) target = $region64
        $region63: #{tpu_custom_call.1} parent=55 // pred_region
          %s607 = sand.u32 %s161, 1
          %s608 = scalar_lea.sflag [#allocation7], %s607
          %s609 = sand.u32 %s161, 1
          %s610 = scalar_lea.vmem [#allocation6], %s609
          %612 = dma.done %s608, 16
        $region64: #{tpu_custom_call.1} parent=55 // pred_fallthru
          _
      $region56: #{tpu_custom_call.1} parent=5 // pred_fallthru
        _
    $region6: #{tpu_custom_call.1} parent=1 // loop_footer
      %s22 = sadd.s32 1, %s18
    $region7: #{tpu_custom_call.1} parent=1 // loop_footer_branch
      %17 = sbr.rel target = $region3
    $region8: #{tpu_custom_call.1} parent=1 // loop_exit
      _
    %613 = vsyncpa [#allocation5], 1
    %s614 = scalar_lea.sflag [#allocation5], 1
    %615 = vsyncpa %s614, 1
    %616 = vsyncpa [#allocation7], 1
    %s617 = scalar_lea.sflag [#allocation7], 1
    %618 = vsyncpa %s617, 1

</llo_original>
